<compile_context>
chip_gen: v7x
topology: tpu7x:2x2x1
jax: 0.10.0
libtpu: 0.0.40
codegen_flags: <defaults>
</compile_context>

<pallas_src>
import functools
import numpy as np
import jax
import jax.numpy as jnp
from jax.experimental import pallas as pl
from jax.experimental.pallas import tpu as pltpu


def _round_up(x, m):
    return (x + m - 1) // m * m


# ------------------------------ Fused kernel body ------------------------------
def _fused_convs_kernel(act_ref, masks_ref, w1_ref, s1_ref, w2_ref, s2_ref, o_ref,
                        *, offsets, p_lanes, use_patch1, use_patch2):
    # act_ref  : (1, Cin_p, P_pad) f32   pooled image, lane-dense flattened (ho, wo)
    # masks_ref: (9, P_pad)        f32   per-tap zero-padding validity masks (precomputed)
    # w*_ref   : bf16 weights with BN scale folded in.
    #              patch path   : (Cout_p, 9*Cin_p)  -> one im2col MXU dot
    #              per-tap path : (9, Cout_p, Cin_p) -> 9 accumulated dots, no patch matrix
    # s*_ref   : (Cout_p, 1) f32  folded BN shift (+ conv bias)
    # o_ref    : (1, Cout2_p, P_pad) f32  lane-dense output for this image
    act = act_ref[0]                                   # (Cin_p, P_pad) f32
    masks = masks_ref[...]                             # (9, P_pad)     f32

    def conv3x3_bn_relu(a, w_ref, s_ref, use_patch):
        # Each tap is a cyclic lane-roll of the flattened (ho, wo) axis, masked to
        # implement zero padding and to stop shifts crossing row / image boundaries.
        taps = []
        acc = None
        for t, off in enumerate(offsets):
            shifted = a if off == 0 else pltpu.roll(a, shift=(-off) % p_lanes, axis=1)
            tap = shifted * masks[t:t + 1, :]          # f32 VPU; mask is exactly 0/1
            if use_patch:
                taps.append(tap)
            else:
                part = jnp.dot(w_ref[t], tap.astype(jnp.bfloat16),
                               preferred_element_type=jnp.float32)
                acc = part if acc is None else acc + part
        if use_patch:
            patches = jnp.concatenate(taps, axis=0).astype(jnp.bfloat16)   # (9*Cin_p, P_pad)
            acc = jnp.dot(w_ref[...], patches, preferred_element_type=jnp.float32)
        return jnp.maximum(acc + s_ref[...], 0.0)      # BN shift + ReLU, f32 epilogue

    a1 = conv3x3_bn_relu(act, w1_ref, s1_ref, use_patch1)      # conv1 output stays on-chip
    o_ref[0] = conv3x3_bn_relu(a1, w2_ref, s2_ref, use_patch2).astype(o_ref.dtype)


# ------------------------------- Parameter setup -------------------------------
def fold_bn(conv_bias, gamma, beta, mean, var, eps=1e-5):
    scale = gamma / jnp.sqrt(var + eps)
    shift = beta + (conv_bias - mean) * scale
    return scale, shift


def init_params(key, in_channels, out_channels):
    # Stacked2Block('standart'): conv_bn_relu(in->out, 3x3, pad=1), conv_bn_relu(out->out, 3x3, pad=1)
    ks = jax.random.split(key, 12)

    def layer(kk, cin, cout):
        w = 0.1 * jax.random.normal(kk[0], (3, 3, cin, cout), jnp.float32)   # HWIO
        b = 0.05 * jax.random.normal(kk[1], (cout,), jnp.float32)
        gamma = 1.0 + 0.1 * jax.random.normal(kk[2], (cout,), jnp.float32)
        beta = 0.1 * jax.random.normal(kk[3], (cout,), jnp.float32)
        rmean = 0.05 * jax.random.normal(kk[4], (cout,), jnp.float32)
        rvar = 1.0 + 0.1 * jnp.abs(jax.random.normal(kk[5], (cout,), jnp.float32))
        scale, shift = fold_bn(b, gamma, beta, rmean, rvar)
        return w, scale, shift

    return (layer(ks[0:6], in_channels, out_channels),
            layer(ks[6:12], out_channels, out_channels))


# --------------------------------- Full module ---------------------------------
def downsampling_block(x_nchw, params, *, patch_k_limit=512):
    # TODO(synk): BatchNorm is eval-mode only (running stats folded into conv weights /
    # per-channel shift at trace time); training-mode batch statistics are not computed.
    N, Cin, H, W = x_nchw.shape
    Ho, Wo = H // 2, W // 2                       # MaxPool2d(2,2) floors odd sizes
    P = Ho * Wo
    P_pad = max(_round_up(P, 128), 128)           # aligned roll width / lane-dense stores

    (w1, scale1, shift1), (w2, scale2, shift2) = params
    C1, C2 = w1.shape[-1], w2.shape[-1]
    Cin_p, C1_p, C2_p = _round_up(Cin, 8), _round_up(C1, 8), _round_up(C2, 8)

    # ---- MaxPool2d(2,2): single fused XLA reduce (reads x once, writes the 4x smaller,
    # already lane-dense pooled tensor).  No transposes anywhere in the data path.
    # TODO(synk): the 2x2 window gather itself is not done inside the Pallas kernel
    # because it needs stride-2 lane/sublane gathers that Mosaic does not lower reliably;
    # this XLA prologue is cheaper than the previous phase-transpose (extra full HBM pass).
    x = x_nchw.astype(jnp.float32)[:, :, :2 * Ho, :2 * Wo]
    pooled = x.reshape(N, Cin, Ho, 2, Wo, 2).max(axis=(3, 5)).reshape(N, Cin, P)
    pooled = jnp.pad(pooled, ((0, 0), (0, Cin_p - Cin), (0, P_pad - P)))

    # ---- Static per-tap roll offsets + zero-padding masks (host-side, shared by both convs).
    p_idx = np.arange(P_pad)
    wo_idx, ho_idx = p_idx % Wo, p_idx // Wo
    in_image = p_idx < P
    masks = np.zeros((9, P_pad), np.float32)
    offsets = []
    t = 0
    for kh in range(3):
        for kw in range(3):
            dh, dw = kh - 1, kw - 1
            valid = (in_image & (wo_idx + dw >= 0) & (wo_idx + dw < Wo)
                     & (ho_idx + dh >= 0) & (ho_idx + dh < Ho))
            masks[t] = valid
            offsets.append(dh * Wo + dw)
            t += 1
    masks = jnp.asarray(masks)

    # Patch-matrix (single K=9*Cin dot) for small K, per-tap accumulation for large K so
    # the 9x im2col intermediate is never materialized (VMEM bound on v7x).
    use_patch1 = 9 * Cin_p <= patch_k_limit
    use_patch2 = 9 * C1_p <= patch_k_limit

    def prep(w, scale, shift, cin, cin_p, cout, cout_p, use_patch):
        wf = (w * scale[None, None, None, :]).astype(jnp.float32)    # fold BN scale
        wf = jnp.pad(wf, ((0, 0), (0, 0), (0, cin_p - cin), (0, cout_p - cout)))
        if use_patch:
            wk = jnp.transpose(wf, (3, 0, 1, 2)).reshape(cout_p, 9 * cin_p)
        else:
            wk = jnp.transpose(wf.reshape(9, cin_p, cout_p), (0, 2, 1))   # (9, cout_p, cin_p)
        sf = jnp.pad(shift, ((0, cout_p - cout),)).reshape(cout_p, 1).astype(jnp.float32)
        return wk.astype(jnp.bfloat16), sf

    w1k, s1k = prep(w1, scale1, shift1, Cin, Cin_p, C1, C1_p, use_patch1)
    w2k, s2k = prep(w2, scale2, shift2, C1, C1_p, C2, C2_p, use_patch2)

    kernel = functools.partial(_fused_convs_kernel, offsets=tuple(offsets), p_lanes=P_pad,
                               use_patch1=use_patch1, use_patch2=use_patch2)

    flops = 2 * N * P_pad * 9 * (Cin_p * C1_p + C1_p * C2_p)
    bytes_accessed = (4 * (pooled.size + masks.size + s1k.size + s2k.size + N * C2_p * P_pad)
                      + 2 * (w1k.size + w2k.size))

    out = pl.pallas_call(
        kernel,
        out_shape=jax.ShapeDtypeStruct((N, C2_p, P_pad), jnp.float32),
        grid=(N,),                                           # one image per grid step
        in_specs=[
            pl.BlockSpec((1, Cin_p, P_pad), lambda i: (i, 0, 0)),
            pl.BlockSpec((9, P_pad), lambda i: (0, 0)),
            pl.BlockSpec(w1k.shape, lambda i: (0,) * w1k.ndim),
            pl.BlockSpec((C1_p, 1), lambda i: (0, 0)),
            pl.BlockSpec(w2k.shape, lambda i: (0,) * w2k.ndim),
            pl.BlockSpec((C2_p, 1), lambda i: (0, 0)),
        ],
        out_specs=pl.BlockSpec((1, C2_p, P_pad), lambda i: (i, 0, 0)),
        compiler_params=pltpu.CompilerParams(
            dimension_semantics=("parallel",),               # megacore: split images across TCs
            vmem_limit_bytes=64 * 1024 * 1024,               # explicit; per-step set stays far below
        ),
        cost_estimate=pl.CostEstimate(flops=flops, transcendentals=0,
                                      bytes_accessed=bytes_accessed),
    )(pooled, masks, w1k, s1k, w2k, s2k)

    return out[:, :C2, :P].reshape(N, C2, Ho, Wo)            # free-ish view back to NCHW


# ------------------------------- Pure-JAX reference ----------------------------
def reference_downsampling_block(x_nchw, params):
    x = jnp.transpose(x_nchw, (0, 2, 3, 1)).astype(jnp.float32)
    N, H, W, C = x.shape
    Ho, Wo = H // 2, W // 2
    x = x[:, :2 * Ho, :2 * Wo, :]
    x = x.reshape(N, Ho, 2, Wo, 2, C).max(axis=(2, 4))
    for (w, scale, shift) in params:
        xp = jnp.pad(x, ((0, 0), (1, 1), (1, 1), (0, 0)))
        y = jax.lax.conv_general_dilated(
            xp, w, window_strides=(1, 1), padding="VALID",
            dimension_numbers=("NHWC", "HWIO", "NHWC"),
            precision=jax.lax.Precision.HIGHEST)
        x = jnp.maximum(y * scale + shift, 0.0)
    return jnp.transpose(x, (0, 3, 1, 2))


if __name__ == "__main__":
    key = jax.random.PRNGKey(0)
    configs = [
        # (N, Cin, H, W, Cout, patch_k_limit)
        (2, 4, 16, 16, 8, 512),    # primary toy case: single im2col dot per conv
        (3, 32, 16, 16, 32, 64),   # forces the per-tap accumulation (large-K) path
        (3, 5, 15, 17, 11, 512),   # odd spatial (pool floors), ragged/padded channels & lanes
    ]
    fn = jax.jit(downsampling_block, static_argnames=("patch_k_limit",))
    for (n, cin, h, w, cout, k_lim) in configs:
        key, kx, kp = jax.random.split(key, 3)
        x = jax.random.normal(kx, (n, cin, h, w), jnp.float32)   # NCHW
        params = init_params(kp, cin, cout)
        out = jax.block_until_ready(fn(x, params, patch_k_limit=k_lim))
        assert out.shape == (n, cout, h // 2, w // 2), out.shape
        ref = reference_downsampling_block(x, params)
        # Tolerance loosened vs. the all-f32 version: MXU operands are bf16 (accumulation f32).
        np.testing.assert_allclose(np.asarray(out), np.asarray(ref), rtol=2e-2, atol=3e-2)
    print("KERNEL_OK")
</pallas_src>

<mosaic_0001>
module attributes {stable_mosaic.version = 11 : i64} {
  func.func @_fused_convs_kernel(%arg0: i32, %arg1: memref<1x8x128xf32, #tpu.memory_space<vmem>>, %arg2: memref<9x128xf32, #tpu.memory_space<vmem>>, %arg3: memref<8x72xbf16, #tpu.memory_space<vmem>>, %arg4: memref<8x1xf32, #tpu.memory_space<vmem>>, %arg5: memref<8x72xbf16, #tpu.memory_space<vmem>>, %arg6: memref<8x1xf32, #tpu.memory_space<vmem>>, %arg7: memref<1x8x128xf32, #tpu.memory_space<vmem>>) attributes {dimension_semantics = [#tpu.dimension_semantics<parallel>], iteration_bounds = array<i64: 2>, scalar_prefetch = 0 : i64, scratch_operands = 0 : i64, tpu.core_type = #tpu.core_type<tc>, window_params = [{transform_indices = @transform_0, window_bounds = array<i64: 1, 8, 128>}, {pipeline_mode = #tpu.pipeline_mode<synchronous>, transform_indices = @transform_1, window_bounds = array<i64: 9, 128>}, {pipeline_mode = #tpu.pipeline_mode<synchronous>, transform_indices = @transform_2, window_bounds = array<i64: 8, 72>}, {pipeline_mode = #tpu.pipeline_mode<synchronous>, transform_indices = @transform_3, window_bounds = array<i64: 8, 1>}, {pipeline_mode = #tpu.pipeline_mode<synchronous>, transform_indices = @transform_4, window_bounds = array<i64: 8, 72>}, {pipeline_mode = #tpu.pipeline_mode<synchronous>, transform_indices = @transform_5, window_bounds = array<i64: 8, 1>}, {transform_indices = @transform_6, window_bounds = array<i64: 1, 8, 128>}]} {
    %c0 = arith.constant 0 : index
    %c0_0 = arith.constant 0 : index
    %c0_1 = arith.constant 0 : index
    %0 = vector.load %arg1[%c0, %c0_0, %c0_1] : memref<1x8x128xf32, #tpu.memory_space<vmem>>, vector<1x8x128xf32>
    %1 = vector.shape_cast %0 : vector<1x8x128xf32> to vector<8x128xf32>
    %c0_2 = arith.constant 0 : index
    %c0_3 = arith.constant 0 : index
    %2 = vector.load %arg2[%c0_2, %c0_3] : memref<9x128xf32, #tpu.memory_space<vmem>>, vector<9x128xf32>
    %c9_i32 = arith.constant 9 : i32
    %3 = tpu.dynamic_rotate %1 by %c9_i32 dim 1 : vector<8x128xf32>, i32 -> vector<8x128xf32>
    %4 = vector.extract_strided_slice %2 {offsets = [0, 0], sizes = [1, 128], strides = [1, 1]} : vector<9x128xf32> to vector<1x128xf32>
    %5 = vector.broadcast %4 : vector<1x128xf32> to vector<8x128xf32>
    %6 = arith.mulf %3, %5 : vector<8x128xf32>
    %c8_i32 = arith.constant 8 : i32
    %7 = tpu.dynamic_rotate %1 by %c8_i32 dim 1 : vector<8x128xf32>, i32 -> vector<8x128xf32>
    %8 = vector.extract_strided_slice %2 {offsets = [1, 0], sizes = [1, 128], strides = [1, 1]} : vector<9x128xf32> to vector<1x128xf32>
    %9 = vector.broadcast %8 : vector<1x128xf32> to vector<8x128xf32>
    %10 = arith.mulf %7, %9 : vector<8x128xf32>
    %c7_i32 = arith.constant 7 : i32
    %11 = tpu.dynamic_rotate %1 by %c7_i32 dim 1 : vector<8x128xf32>, i32 -> vector<8x128xf32>
    %12 = vector.extract_strided_slice %2 {offsets = [2, 0], sizes = [1, 128], strides = [1, 1]} : vector<9x128xf32> to vector<1x128xf32>
    %13 = vector.broadcast %12 : vector<1x128xf32> to vector<8x128xf32>
    %14 = arith.mulf %11, %13 : vector<8x128xf32>
    %c1_i32 = arith.constant 1 : i32
    %15 = tpu.dynamic_rotate %1 by %c1_i32 dim 1 : vector<8x128xf32>, i32 -> vector<8x128xf32>
    %16 = vector.extract_strided_slice %2 {offsets = [3, 0], sizes = [1, 128], strides = [1, 1]} : vector<9x128xf32> to vector<1x128xf32>
    %17 = vector.broadcast %16 : vector<1x128xf32> to vector<8x128xf32>
    %18 = arith.mulf %15, %17 : vector<8x128xf32>
    %19 = vector.extract_strided_slice %2 {offsets = [4, 0], sizes = [1, 128], strides = [1, 1]} : vector<9x128xf32> to vector<1x128xf32>
    %20 = vector.broadcast %19 : vector<1x128xf32> to vector<8x128xf32>
    %21 = arith.mulf %1, %20 : vector<8x128xf32>
    %c127_i32 = arith.constant 127 : i32
    %22 = tpu.dynamic_rotate %1 by %c127_i32 dim 1 : vector<8x128xf32>, i32 -> vector<8x128xf32>
    %23 = vector.extract_strided_slice %2 {offsets = [5, 0], sizes = [1, 128], strides = [1, 1]} : vector<9x128xf32> to vector<1x128xf32>
    %24 = vector.broadcast %23 : vector<1x128xf32> to vector<8x128xf32>
    %25 = arith.mulf %22, %24 : vector<8x128xf32>
    %c121_i32 = arith.constant 121 : i32
    %26 = tpu.dynamic_rotate %1 by %c121_i32 dim 1 : vector<8x128xf32>, i32 -> vector<8x128xf32>
    %27 = vector.extract_strided_slice %2 {offsets = [6, 0], sizes = [1, 128], strides = [1, 1]} : vector<9x128xf32> to vector<1x128xf32>
    %28 = vector.broadcast %27 : vector<1x128xf32> to vector<8x128xf32>
    %29 = arith.mulf %26, %28 : vector<8x128xf32>
    %c120_i32 = arith.constant 120 : i32
    %30 = tpu.dynamic_rotate %1 by %c120_i32 dim 1 : vector<8x128xf32>, i32 -> vector<8x128xf32>
    %31 = vector.extract_strided_slice %2 {offsets = [7, 0], sizes = [1, 128], strides = [1, 1]} : vector<9x128xf32> to vector<1x128xf32>
    %32 = vector.broadcast %31 : vector<1x128xf32> to vector<8x128xf32>
    %33 = arith.mulf %30, %32 : vector<8x128xf32>
    %c119_i32 = arith.constant 119 : i32
    %34 = tpu.dynamic_rotate %1 by %c119_i32 dim 1 : vector<8x128xf32>, i32 -> vector<8x128xf32>
    %35 = vector.extract_strided_slice %2 {offsets = [8, 0], sizes = [1, 128], strides = [1, 1]} : vector<9x128xf32> to vector<1x128xf32>
    %36 = vector.broadcast %35 : vector<1x128xf32> to vector<8x128xf32>
    %37 = arith.mulf %34, %36 : vector<8x128xf32>
    %38 = tpu.concatenate %6, %10, %14, %18, %21, %25, %29, %33, %37 in 0 : vector<8x128xf32>, vector<8x128xf32>, vector<8x128xf32>, vector<8x128xf32>, vector<8x128xf32>, vector<8x128xf32>, vector<8x128xf32>, vector<8x128xf32>, vector<8x128xf32> -> vector<72x128xf32>
    %39 = arith.truncf %38 : vector<72x128xf32> to vector<72x128xbf16>
    %c0_4 = arith.constant 0 : index
    %c0_5 = arith.constant 0 : index
    %40 = vector.load %arg3[%c0_4, %c0_5] : memref<8x72xbf16, #tpu.memory_space<vmem>>, vector<8x72xbf16>
    %cst = arith.constant dense<0.000000e+00> : vector<8x128xf32>
    %41 = tpu.matmul %40, %39, %cst {dimension_numbers = #tpu.dot_dimension_numbers<[1], [0], [0], [1], [0, 0, 1, 1], [], []>} : vector<8x72xbf16>, vector<72x128xbf16>, vector<8x128xf32> -> vector<8x128xf32>
    %c0_6 = arith.constant 0 : index
    %c0_7 = arith.constant 0 : index
    %42 = vector.load %arg4[%c0_6, %c0_7] : memref<8x1xf32, #tpu.memory_space<vmem>>, vector<8x1xf32>
    %43 = vector.broadcast %42 : vector<8x1xf32> to vector<8x128xf32>
    %44 = arith.addf %41, %43 : vector<8x128xf32>
    %cst_8 = arith.constant 0.000000e+00 : f32
    %45 = vector.broadcast %cst_8 : f32 to vector<8x128xf32>
    %46 = arith.maximumf %44, %45 : vector<8x128xf32>
    %c9_i32_9 = arith.constant 9 : i32
    %47 = tpu.dynamic_rotate %46 by %c9_i32_9 dim 1 : vector<8x128xf32>, i32 -> vector<8x128xf32>
    %48 = vector.extract_strided_slice %2 {offsets = [0, 0], sizes = [1, 128], strides = [1, 1]} : vector<9x128xf32> to vector<1x128xf32>
    %49 = vector.broadcast %48 : vector<1x128xf32> to vector<8x128xf32>
    %50 = arith.mulf %47, %49 : vector<8x128xf32>
    %c8_i32_10 = arith.constant 8 : i32
    %51 = tpu.dynamic_rotate %46 by %c8_i32_10 dim 1 : vector<8x128xf32>, i32 -> vector<8x128xf32>
    %52 = vector.extract_strided_slice %2 {offsets = [1, 0], sizes = [1, 128], strides = [1, 1]} : vector<9x128xf32> to vector<1x128xf32>
    %53 = vector.broadcast %52 : vector<1x128xf32> to vector<8x128xf32>
    %54 = arith.mulf %51, %53 : vector<8x128xf32>
    %c7_i32_11 = arith.constant 7 : i32
    %55 = tpu.dynamic_rotate %46 by %c7_i32_11 dim 1 : vector<8x128xf32>, i32 -> vector<8x128xf32>
    %56 = vector.extract_strided_slice %2 {offsets = [2, 0], sizes = [1, 128], strides = [1, 1]} : vector<9x128xf32> to vector<1x128xf32>
    %57 = vector.broadcast %56 : vector<1x128xf32> to vector<8x128xf32>
    %58 = arith.mulf %55, %57 : vector<8x128xf32>
    %c1_i32_12 = arith.constant 1 : i32
    %59 = tpu.dynamic_rotate %46 by %c1_i32_12 dim 1 : vector<8x128xf32>, i32 -> vector<8x128xf32>
    %60 = vector.extract_strided_slice %2 {offsets = [3, 0], sizes = [1, 128], strides = [1, 1]} : vector<9x128xf32> to vector<1x128xf32>
    %61 = vector.broadcast %60 : vector<1x128xf32> to vector<8x128xf32>
    %62 = arith.mulf %59, %61 : vector<8x128xf32>
    %63 = vector.extract_strided_slice %2 {offsets = [4, 0], sizes = [1, 128], strides = [1, 1]} : vector<9x128xf32> to vector<1x128xf32>
    %64 = vector.broadcast %63 : vector<1x128xf32> to vector<8x128xf32>
    %65 = arith.mulf %46, %64 : vector<8x128xf32>
    %c127_i32_13 = arith.constant 127 : i32
    %66 = tpu.dynamic_rotate %46 by %c127_i32_13 dim 1 : vector<8x128xf32>, i32 -> vector<8x128xf32>
    %67 = vector.extract_strided_slice %2 {offsets = [5, 0], sizes = [1, 128], strides = [1, 1]} : vector<9x128xf32> to vector<1x128xf32>
    %68 = vector.broadcast %67 : vector<1x128xf32> to vector<8x128xf32>
    %69 = arith.mulf %66, %68 : vector<8x128xf32>
    %c121_i32_14 = arith.constant 121 : i32
    %70 = tpu.dynamic_rotate %46 by %c121_i32_14 dim 1 : vector<8x128xf32>, i32 -> vector<8x128xf32>
    %71 = vector.extract_strided_slice %2 {offsets = [6, 0], sizes = [1, 128], strides = [1, 1]} : vector<9x128xf32> to vector<1x128xf32>
    %72 = vector.broadcast %71 : vector<1x128xf32> to vector<8x128xf32>
    %73 = arith.mulf %70, %72 : vector<8x128xf32>
    %c120_i32_15 = arith.constant 120 : i32
    %74 = tpu.dynamic_rotate %46 by %c120_i32_15 dim 1 : vector<8x128xf32>, i32 -> vector<8x128xf32>
    %75 = vector.extract_strided_slice %2 {offsets = [7, 0], sizes = [1, 128], strides = [1, 1]} : vector<9x128xf32> to vector<1x128xf32>
    %76 = vector.broadcast %75 : vector<1x128xf32> to vector<8x128xf32>
    %77 = arith.mulf %74, %76 : vector<8x128xf32>
    %c119_i32_16 = arith.constant 119 : i32
    %78 = tpu.dynamic_rotate %46 by %c119_i32_16 dim 1 : vector<8x128xf32>, i32 -> vector<8x128xf32>
    %79 = vector.extract_strided_slice %2 {offsets = [8, 0], sizes = [1, 128], strides = [1, 1]} : vector<9x128xf32> to vector<1x128xf32>
    %80 = vector.broadcast %79 : vector<1x128xf32> to vector<8x128xf32>
    %81 = arith.mulf %78, %80 : vector<8x128xf32>
    %82 = tpu.concatenate %50, %54, %58, %62, %65, %69, %73, %77, %81 in 0 : vector<8x128xf32>, vector<8x128xf32>, vector<8x128xf32>, vector<8x128xf32>, vector<8x128xf32>, vector<8x128xf32>, vector<8x128xf32>, vector<8x128xf32>, vector<8x128xf32> -> vector<72x128xf32>
    %83 = arith.truncf %82 : vector<72x128xf32> to vector<72x128xbf16>
    %c0_17 = arith.constant 0 : index
    %c0_18 = arith.constant 0 : index
    %84 = vector.load %arg5[%c0_17, %c0_18] : memref<8x72xbf16, #tpu.memory_space<vmem>>, vector<8x72xbf16>
    %cst_19 = arith.constant dense<0.000000e+00> : vector<8x128xf32>
    %85 = tpu.matmul %84, %83, %cst_19 {dimension_numbers = #tpu.dot_dimension_numbers<[1], [0], [0], [1], [0, 0, 1, 1], [], []>} : vector<8x72xbf16>, vector<72x128xbf16>, vector<8x128xf32> -> vector<8x128xf32>
    %c0_20 = arith.constant 0 : index
    %c0_21 = arith.constant 0 : index
    %86 = vector.load %arg6[%c0_20, %c0_21] : memref<8x1xf32, #tpu.memory_space<vmem>>, vector<8x1xf32>
    %87 = vector.broadcast %86 : vector<8x1xf32> to vector<8x128xf32>
    %88 = arith.addf %85, %87 : vector<8x128xf32>
    %cst_22 = arith.constant 0.000000e+00 : f32
    %89 = vector.broadcast %cst_22 : f32 to vector<8x128xf32>
    %90 = arith.maximumf %88, %89 : vector<8x128xf32>
    %c0_23 = arith.constant 0 : index
    %c0_24 = arith.constant 0 : index
    %c0_25 = arith.constant 0 : index
    %91 = vector.load %arg7[%c0_23, %c0_24, %c0_25] : memref<1x8x128xf32, #tpu.memory_space<vmem>>, vector<1x8x128xf32>
    %92 = vector.shape_cast %91 : vector<1x8x128xf32> to vector<8x128xf32>
    %93 = vector.shape_cast %90 : vector<8x128xf32> to vector<1x8x128xf32>
    tpu.vector_store %arg7[%c0_23, %c0_24, %c0_25], %93 {strides = array<i32>} : memref<1x8x128xf32, #tpu.memory_space<vmem>>, vector<1x8x128xf32>,
    return
  }
  func.func @transform_0(%arg0: i32) -> (i32, i32, i32) {
    %c0_i32 = arith.constant 0 : i32
    %c0_i32_0 = arith.constant 0 : i32
    %c0_i32_1 = arith.constant 0 : i32
    return %arg0, %c0_i32, %c0_i32_0 : i32, i32, i32
  }
  func.func @transform_1(%arg0: i32) -> (i32, i32) {
    %c0_i32 = arith.constant 0 : i32
    %c0_i32_0 = arith.constant 0 : i32
    %c0_i32_1 = arith.constant 0 : i32
    return %c0_i32, %c0_i32_0 : i32, i32
  }
  func.func @transform_2(%arg0: i32) -> (i32, i32) {
    %c0_i32 = arith.constant 0 : i32
    %c0_i32_0 = arith.constant 0 : i32
    %c0_i32_1 = arith.constant 0 : i32
    return %c0_i32, %c0_i32_0 : i32, i32
  }
  func.func @transform_3(%arg0: i32) -> (i32, i32) {
    %c0_i32 = arith.constant 0 : i32
    %c0_i32_0 = arith.constant 0 : i32
    %c0_i32_1 = arith.constant 0 : i32
    return %c0_i32, %c0_i32_0 : i32, i32
  }
  func.func @transform_4(%arg0: i32) -> (i32, i32) {
    %c0_i32 = arith.constant 0 : i32
    %c0_i32_0 = arith.constant 0 : i32
    %c0_i32_1 = arith.constant 0 : i32
    return %c0_i32, %c0_i32_0 : i32, i32
  }
  func.func @transform_5(%arg0: i32) -> (i32, i32) {
    %c0_i32 = arith.constant 0 : i32
    %c0_i32_0 = arith.constant 0 : i32
    %c0_i32_1 = arith.constant 0 : i32
    return %c0_i32, %c0_i32_0 : i32, i32
  }
  func.func @transform_6(%arg0: i32) -> (i32, i32, i32) {
    %c0_i32 = arith.constant 0 : i32
    %c0_i32_0 = arith.constant 0 : i32
    %c0_i32_1 = arith.constant 0 : i32
    return %arg0, %c0_i32, %c0_i32_0 : i32, i32, i32
  }
}

</mosaic_0001>

<llo_original>
// kernel: downsampling_block.1
$region0: #{downsampling_block.1}
  #allocation0 [shape = 'u32[]', space=smem, size = 0x4, offset = 0x4, fixed_abs, tag = 'smem constant byte address 0x4 - core index']
  #allocation1 [shape = 'u32[144,128]{1,0:T(1,128)}', space=vmem, size = 0x12000, scoped, tag = 'internal scratch']
  %s0 = inlined_call_operand.hbm [shape: f32[2,8,128], index: 0, kind: input, shape index: {}]
  %s1 = inlined_call_operand.hbm [shape: f32[9,128], index: 1, kind: input, shape index: {}]
  %s2 = inlined_call_operand.hbm [shape: bf16[8,72], index: 2, kind: input, shape index: {}]
  %s3 = inlined_call_operand.hbm [shape: f32[8,1], index: 3, kind: input, shape index: {}]
  %s4 = inlined_call_operand.hbm [shape: bf16[8,72], index: 4, kind: input, shape index: {}]
  %s5 = inlined_call_operand.hbm [shape: f32[8,1], index: 5, kind: input, shape index: {}]
  %s6 = inlined_call_operand.hbm [shape: f32[2,8,128], index: 6, kind: output, shape index: {}]
  %s7 = sld [smem:[#allocation0]]
  $region81: #{downsampling_block.1} parent=0
    _
  %s9 = ssub.s32 1, %s7
  %s10 = scalar_select 0, %s9, %s7
  $region1: #{downsampling_block.1} parent=0
    #allocation2 [shape = 'u8[8192]{0}', space=vmem, size = 0x2000, scoped, tag = 'input window, operand 0']
    #allocation3 [shape = 's32[2]{0}', space=sflag, size = 0x8, scoped, tag = 'scoped memory for downsampling_block.1']
    #allocation4 [shape = 's32[2]{0}', space=sflag, size = 0x8, scoped, tag = 'scoped memory for downsampling_block.1']
    #allocation5 [shape = 'u8[8192]{0}', space=vmem, size = 0x2000, scoped, tag = 'input window, operand 1, single buffered']
    #allocation6 [shape = 's32[1]{0}', space=sflag, size = 0x4, scoped, tag = 'scoped memory for downsampling_block.1']
    #allocation7 [shape = 'u8[2048]{0}', space=vmem, size = 0x800, scoped, tag = 'input window, operand 2, single buffered']
    #allocation8 [shape = 'u8[4096]{0}', space=vmem, size = 0x1000, scoped, tag = 'input window, operand 3, single buffered']
    #allocation9 [shape = 's32[1]{0}', space=sflag, size = 0x4, scoped, tag = 'scoped memory for downsampling_block.1']
    #allocation10 [shape = 'u8[2048]{0}', space=vmem, size = 0x800, scoped, tag = 'input window, operand 4, single buffered']
    #allocation11 [shape = 'u8[4096]{0}', space=vmem, size = 0x1000, scoped, tag = 'input window, operand 5, single buffered']
    #allocation12 [shape = 's32[1]{0}', space=sflag, size = 0x4, scoped, tag = 'scoped memory for downsampling_block.1']
    #allocation13 [shape = 'u8[8192]{0}', space=vmem, size = 0x2000, scoped, tag = 'output window, operand 0']
    %11 = vsyncpa [#allocation3], 0
    %s12 = scalar_lea.sflag [#allocation3], 1
    %13 = vsyncpa %s12, 0
    %14 = vsyncpa [#allocation6], 0
    %15 = vsyncpa [#allocation9], 0
    %16 = vsyncpa [#allocation12], 0
    %17 = vsyncpa [#allocation4], 0
    %s18 = scalar_lea.sflag [#allocation4], 1
    %19 = vsyncpa %s18, 0
    loop: start=0, step=1, limit=4
    $region2: #{downsampling_block.1} parent=1 // loop_pre_header
      _
    $region3: #{downsampling_block.1} parent=1 // loop_header
      %s21 = sphi 0, %s25
      %p22 = scmp.ge.s32.totalorder %s21, 4
      %s31 = sphi 0, %s33
      %s34 = sphi 0, %s31
      %s35 = sphi 0, %s34
      %s51 = sphi 0, %s35
      %s55 = sphi 0, %s55
      %s57 = sphi 0, %s55
      %s58 = sphi 0, %s57
      %s72 = sphi 0, %s58
      %s76 = sphi 0, %s76
      %s78 = sphi 0, %s76
      %s79 = sphi 0, %s78
      %s93 = sphi 0, %s79
      %s97 = sphi 0, %s97
      %s99 = sphi 0, %s97
      %s100 = sphi 0, %s99
      %s114 = sphi 0, %s100
      %s118 = sphi 0, %s118
      %s120 = sphi 0, %s118
      %s121 = sphi 0, %s120
      %s135 = sphi 0, %s121
      %s139 = sphi 0, %s139
      %s141 = sphi 0, %s139
      %s142 = sphi 0, %s141
      %s156 = sphi 0, %s142
      %s162 = sphi 0, %s164
      %s165 = sphi 0, %s162
      %s166 = sphi 0, %s165
      %s182 = sphi 0, %s166
    $region4: #{downsampling_block.1} parent=1 // loop_header_branch
      %24 = sbr.rel (%p22) target = $region8
    $region5: #{downsampling_block.1} parent=1 // loop_body
      %s26 = ssub.s32 %s21, 1
      %s27 = ssub.s32 %s21, 2
      %s28 = sadd.s32 %s21, 1
      %s29 = ssub.s32 %s21, %s28
      %p30 = scmp.eq.s32.totalorder %s29, 0
      %s32 = sadd.s32 %s31, 1
      %s33 = scalar_select %p30, %s31, %s32
      %p36 = pneg %p30
      %p37 = scmp.eq.s32.totalorder %s21, 1
      %p38 = por %p36, %p37
      %p39 = scmp.ne.s32.totalorder %s31, %s34
      %p40 = scmp.eq.s32.totalorder %s21, 0
      %p41 = por %p39, %p40
      %p42 = scmp.ne.s32.totalorder %s31, %s34
      %p43 = scmp.eq.s32.totalorder %s26, 1
      %p44 = por %p42, %p43
      %p45 = scmp.ne.s32.totalorder %s34, %s35
      %p46 = scmp.eq.s32.totalorder %s26, 0
      %p47 = por %p45, %p46
      %p48 = scmp.ne.s32.totalorder %s34, %s35
      %p49 = scmp.eq.s32.totalorder %s27, 1
      %p50 = por %p48, %p49
      %p52 = scmp.ne.s32.totalorder %s35, %s51
      %p53 = scmp.eq.s32.totalorder %s27, 0
      %p54 = por %p52, %p53
      %s56 = sadd.s32 %s55, 1
      %p59 = scmp.eq.s32.totalorder %s21, 1
      %p60 = scmp.ne.s32.totalorder %s55, %s57
      %p61 = scmp.eq.s32.totalorder %s21, 0
      %p62 = por %p60, %p61
      %p63 = scmp.ne.s32.totalorder %s55, %s57
      %p64 = scmp.eq.s32.totalorder %s26, 1
      %p65 = por %p63, %p64
      %p66 = scmp.ne.s32.totalorder %s57, %s58
      %p67 = scmp.eq.s32.totalorder %s26, 0
      %p68 = por %p66, %p67
      %p69 = scmp.ne.s32.totalorder %s57, %s58
      %p70 = scmp.eq.s32.totalorder %s27, 1
      %p71 = por %p69, %p70
      %p73 = scmp.ne.s32.totalorder %s58, %s72
      %p74 = scmp.eq.s32.totalorder %s27, 0
      %p75 = por %p73, %p74
      %s77 = sadd.s32 %s76, 1
      %p80 = scmp.eq.s32.totalorder %s21, 1
      %p81 = scmp.ne.s32.totalorder %s76, %s78
      %p82 = scmp.eq.s32.totalorder %s21, 0
      %p83 = por %p81, %p82
      %p84 = scmp.ne.s32.totalorder %s76, %s78
      %p85 = scmp.eq.s32.totalorder %s26, 1
      %p86 = por %p84, %p85
      %p87 = scmp.ne.s32.totalorder %s78, %s79
      %p88 = scmp.eq.s32.totalorder %s26, 0
      %p89 = por %p87, %p88
      %p90 = scmp.ne.s32.totalorder %s78, %s79
      %p91 = scmp.eq.s32.totalorder %s27, 1
      %p92 = por %p90, %p91
      %p94 = scmp.ne.s32.totalorder %s79, %s93
      %p95 = scmp.eq.s32.totalorder %s27, 0
      %p96 = por %p94, %p95
      %s98 = sadd.s32 %s97, 1
      %p101 = scmp.eq.s32.totalorder %s21, 1
      %p102 = scmp.ne.s32.totalorder %s97, %s99
      %p103 = scmp.eq.s32.totalorder %s21, 0
      %p104 = por %p102, %p103
      %p105 = scmp.ne.s32.totalorder %s97, %s99
      %p106 = scmp.eq.s32.totalorder %s26, 1
      %p107 = por %p105, %p106
      %p108 = scmp.ne.s32.totalorder %s99, %s100
      %p109 = scmp.eq.s32.totalorder %s26, 0
      %p110 = por %p108, %p109
      %p111 = scmp.ne.s32.totalorder %s99, %s100
      %p112 = scmp.eq.s32.totalorder %s27, 1
      %p113 = por %p111, %p112
      %p115 = scmp.ne.s32.totalorder %s100, %s114
      %p116 = scmp.eq.s32.totalorder %s27, 0
      %p117 = por %p115, %p116
      %s119 = sadd.s32 %s118, 1
      %p122 = scmp.eq.s32.totalorder %s21, 1
      %p123 = scmp.ne.s32.totalorder %s118, %s120
      %p124 = scmp.eq.s32.totalorder %s21, 0
      %p125 = por %p123, %p124
      %p126 = scmp.ne.s32.totalorder %s118, %s120
      %p127 = scmp.eq.s32.totalorder %s26, 1
      %p128 = por %p126, %p127
      %p129 = scmp.ne.s32.totalorder %s120, %s121
      %p130 = scmp.eq.s32.totalorder %s26, 0
      %p131 = por %p129, %p130
      %p132 = scmp.ne.s32.totalorder %s120, %s121
      %p133 = scmp.eq.s32.totalorder %s27, 1
      %p134 = por %p132, %p133
      %p136 = scmp.ne.s32.totalorder %s121, %s135
      %p137 = scmp.eq.s32.totalorder %s27, 0
      %p138 = por %p136, %p137
      %s140 = sadd.s32 %s139, 1
      %p143 = scmp.eq.s32.totalorder %s21, 1
      %p144 = scmp.ne.s32.totalorder %s139, %s141
      %p145 = scmp.eq.s32.totalorder %s21, 0
      %p146 = por %p144, %p145
      %p147 = scmp.ne.s32.totalorder %s139, %s141
      %p148 = scmp.eq.s32.totalorder %s26, 1
      %p149 = por %p147, %p148
      %p150 = scmp.ne.s32.totalorder %s141, %s142
      %p151 = scmp.eq.s32.totalorder %s26, 0
      %p152 = por %p150, %p151
      %p153 = scmp.ne.s32.totalorder %s141, %s142
      %p154 = scmp.eq.s32.totalorder %s27, 1
      %p155 = por %p153, %p154
      %p157 = scmp.ne.s32.totalorder %s142, %s156
      %p158 = scmp.eq.s32.totalorder %s27, 0
      %p159 = por %p157, %p158
      %s160 = ssub.s32 %s21, %s28
      %p161 = scmp.eq.s32.totalorder %s160, 0
      %s163 = sadd.s32 %s162, 1
      %s164 = scalar_select %p161, %s162, %s163
      %p167 = pneg %p161
      %p168 = scmp.eq.s32.totalorder %s21, 1
      %p169 = por %p167, %p168
      %p170 = scmp.ne.s32.totalorder %s162, %s165
      %p171 = scmp.eq.s32.totalorder %s21, 0
      %p172 = por %p170, %p171
      %p173 = scmp.ne.s32.totalorder %s162, %s165
      %p174 = scmp.eq.s32.totalorder %s26, 1
      %p175 = por %p173, %p174
      %p176 = scmp.ne.s32.totalorder %s165, %s166
      %p177 = scmp.eq.s32.totalorder %s26, 0
      %p178 = por %p176, %p177
      %p179 = scmp.ne.s32.totalorder %s165, %s166
      %p180 = scmp.eq.s32.totalorder %s27, 1
      %p181 = por %p179, %p180
      %p183 = scmp.ne.s32.totalorder %s166, %s182
      %p184 = scmp.eq.s32.totalorder %s27, 0
      %p185 = por %p183, %p184
      %p186 = scmp.le.s32.totalorder 1, %s21
      %p187 = scmp.lt.s32.totalorder %s21, 3
      %p188 = pnand %p186, %p187
      %p189 = pneg %p188
      // Predicated region
      $region9: #{downsampling_block.1} parent=5 // pred_check
        _
      $region10: #{downsampling_block.1} parent=5 // pred_check_branch
        %191 = sbr.rel (%p188) target = $region12
      $region11: #{downsampling_block.1} parent=5 // pred_region
        %s192 = ssub.s32 %s21, 1
        // Predicated region
        $region13: #{downsampling_block.1} parent=11 // pred_check
          %p193 = pneg %p68
        $region14: #{downsampling_block.1} parent=11 // pred_check_branch
          %195 = sbr.rel (%p193) target = $region16
        $region15: #{downsampling_block.1} parent=11 // pred_region
          %s197 = ssub.s32 256, 256
          %198 = vsyncadd [#allocation6], %s197
          %s199 = sshll.u32 [#allocation5], 4
          %s200 = int_to_ptr.vmem [resolvable:$true] %s199
          %205 = dma.hbm_to_vmem [thread:$0]  %s1, 256, %s200, [#allocation6], 128, 128, 8
        $region16: #{downsampling_block.1} parent=11 // pred_fallthru
          _
        // Predicated region
        $region17: #{downsampling_block.1} parent=11 // pred_check
          %p206 = pneg %p89
        $region18: #{downsampling_block.1} parent=11 // pred_check_branch
          %208 = sbr.rel (%p206) target = $region20
        $region19: #{downsampling_block.1} parent=11 // pred_region
          %s210 = ssub.s32 64, 64
          %211 = vsyncadd [#allocation6], %s210
          %s213 = sshll.u32 [#allocation7], 4
          %s214 = int_to_ptr.vmem [resolvable:$true] %s213
          %216 = dma.hbm_to_vmem [thread:$0]  %s2, 64, %s214, [#allocation6]
        $region20: #{downsampling_block.1} parent=11 // pred_fallthru
          _
        // Predicated region
        $region21: #{downsampling_block.1} parent=11 // pred_check
          %p217 = pneg %p110
        $region22: #{downsampling_block.1} parent=11 // pred_check_branch
          %219 = sbr.rel (%p217) target = $region24
        $region23: #{downsampling_block.1} parent=11 // pred_region
          %s221 = ssub.s32 128, 128
          %222 = vsyncadd [#allocation9], %s221
          %s224 = sshll.u32 [#allocation8], 4
          %s225 = int_to_ptr.vmem [resolvable:$true] %s224
          %227 = dma.hbm_to_vmem [thread:$0]  %s3, 128, %s225, [#allocation9]
        $region24: #{downsampling_block.1} parent=11 // pred_fallthru
          _
        // Predicated region
        $region25: #{downsampling_block.1} parent=11 // pred_check
          %p228 = pneg %p131
        $region26: #{downsampling_block.1} parent=11 // pred_check_branch
          %230 = sbr.rel (%p228) target = $region28
        $region27: #{downsampling_block.1} parent=11 // pred_region
          %s232 = ssub.s32 64, 64
          %233 = vsyncadd [#allocation9], %s232
          %s235 = sshll.u32 [#allocation10], 4
          %s236 = int_to_ptr.vmem [resolvable:$true] %s235
          %238 = dma.hbm_to_vmem [thread:$0]  %s4, 64, %s236, [#allocation9]
        $region28: #{downsampling_block.1} parent=11 // pred_fallthru
          _
        // Predicated region
        $region29: #{downsampling_block.1} parent=11 // pred_check
          %p239 = pneg %p152
        $region30: #{downsampling_block.1} parent=11 // pred_check_branch
          %241 = sbr.rel (%p239) target = $region32
        $region31: #{downsampling_block.1} parent=11 // pred_region
          %s243 = ssub.s32 128, 128
          %244 = vsyncadd [#allocation12], %s243
          %s246 = sshll.u32 [#allocation11], 4
          %s247 = int_to_ptr.vmem [resolvable:$true] %s246
          %249 = dma.hbm_to_vmem [thread:$0]  %s5, 128, %s247, [#allocation12]
        $region32: #{downsampling_block.1} parent=11 // pred_fallthru
          _
      $region12: #{downsampling_block.1} parent=5 // pred_fallthru
        _
      %p250 = scmp.lt.s32.totalorder %s21, 2
      // Predicated region
      $region33: #{downsampling_block.1} parent=5 // pred_check
        %p251 = pneg %p250
      $region34: #{downsampling_block.1} parent=5 // pred_check_branch
        %253 = sbr.rel (%p251) target = $region36
      $region35: #{downsampling_block.1} parent=5 // pred_region
        // Predicated region
        $region37: #{downsampling_block.1} parent=35 // pred_check
          %p254 = pneg %p41
        $region38: #{downsampling_block.1} parent=35 // pred_check_branch
          %256 = sbr.rel (%p254) target = $region40
        $region39: #{downsampling_block.1} parent=35 // pred_region
          %s257 = sand.u32 %s31, 1
          %s258 = scalar_lea.sflag [#allocation3], %s257
          %s259 = sand.u32 %s31, 1
          %s260 = smul.addr %s259, 8
          %s261 = scalar_lea.vmem [#allocation2], %s260
          %s263 = ssub.s32 128, 128
          %264 = vsyncadd %s258, %s263
          %s265 = smul.addr %s21, 128
          %s266 = scalar_lea.hbm %s0, %s265
          %s268 = sshll.u32 %s261, 4
          %s269 = int_to_ptr.vmem [resolvable:$true] %s268
          %271 = dma.hbm_to_vmem [thread:$0]  %s266, 128, %s269, %s258
        $region40: #{downsampling_block.1} parent=35 // pred_fallthru
          _
      $region36: #{downsampling_block.1} parent=5 // pred_fallthru
        _
      %p272 = scmp.le.s32.totalorder 1, %s21
      %p273 = scmp.lt.s32.totalorder %s21, 3
      %p274 = pnand %p272, %p273
      %p275 = pneg %p274
      // Predicated region
      $region41: #{downsampling_block.1} parent=5 // pred_check
        _
      $region42: #{downsampling_block.1} parent=5 // pred_check_branch
        %277 = sbr.rel (%p274) target = $region44
      $region43: #{downsampling_block.1} parent=5 // pred_region
        %s278 = ssub.s32 %s21, 1
        %s279 = sand.u32 %s34, 1
        %s280 = scalar_lea.sflag [#allocation3], %s279
        %s281 = sand.u32 %s34, 1
        %s282 = smul.addr %s281, 8
        %s283 = scalar_lea.vmem [#allocation2], %s282
        // Predicated region
        $region45: #{downsampling_block.1} parent=43 // pred_check
          %p284 = pneg %p47
        $region46: #{downsampling_block.1} parent=43 // pred_check_branch
          %286 = sbr.rel (%p284) target = $region48
        $region47: #{downsampling_block.1} parent=43 // pred_region
          %287 = dma.done %s280, 128
        $region48: #{downsampling_block.1} parent=43 // pred_fallthru
          _
        // Predicated region
        $region49: #{downsampling_block.1} parent=43 // pred_check
          %p288 = pneg %p68
        $region50: #{downsampling_block.1} parent=43 // pred_check_branch
          %290 = sbr.rel (%p288) target = $region52
        $region51: #{downsampling_block.1} parent=43 // pred_region
          %291 = dma.done [#allocation6], 256
        $region52: #{downsampling_block.1} parent=43 // pred_fallthru
          _
        // Predicated region
        $region53: #{downsampling_block.1} parent=43 // pred_check
          %p292 = pneg %p89
        $region54: #{downsampling_block.1} parent=43 // pred_check_branch
          %294 = sbr.rel (%p292) target = $region56
        $region55: #{downsampling_block.1} parent=43 // pred_region
          %295 = dma.done [#allocation6], 64
        $region56: #{downsampling_block.1} parent=43 // pred_fallthru
          _
        // Predicated region
        $region57: #{downsampling_block.1} parent=43 // pred_check
          %p296 = pneg %p110
        $region58: #{downsampling_block.1} parent=43 // pred_check_branch
          %298 = sbr.rel (%p296) target = $region60
        $region59: #{downsampling_block.1} parent=43 // pred_region
          %299 = dma.done [#allocation9], 128
        $region60: #{downsampling_block.1} parent=43 // pred_fallthru
          _
        // Predicated region
        $region61: #{downsampling_block.1} parent=43 // pred_check
          %p300 = pneg %p131
        $region62: #{downsampling_block.1} parent=43 // pred_check_branch
          %302 = sbr.rel (%p300) target = $region64
        $region63: #{downsampling_block.1} parent=43 // pred_region
          %303 = dma.done [#allocation9], 64
        $region64: #{downsampling_block.1} parent=43 // pred_fallthru
          _
        // Predicated region
        $region65: #{downsampling_block.1} parent=43 // pred_check
          %p304 = pneg %p152
        $region66: #{downsampling_block.1} parent=43 // pred_check_branch
          %306 = sbr.rel (%p304) target = $region68
        $region67: #{downsampling_block.1} parent=43 // pred_region
          %307 = dma.done [#allocation12], 128
        $region68: #{downsampling_block.1} parent=43 // pred_fallthru
          _
        %s308 = sand.u32 %s34, 1
        %s309 = scalar_lea.sflag [#allocation3], %s308
        %s310 = sand.u32 %s34, 1
        %s311 = smul.addr %s310, 8
        %s312 = scalar_lea.vmem [#allocation2], %s311
        %p313 = pneg %p47
        %p314 = pneg %p44
        %p315 = pneg %p68
        %p316 = pneg %p65
        %p317 = pneg %p89
        %p318 = pneg %p86
        %p319 = pneg %p110
        %p320 = pneg %p107
        %p321 = pneg %p131
        %p322 = pneg %p128
        %p323 = pneg %p152
        %p324 = pneg %p149
        %p325 = pneg %p178
        %p326 = pneg %p175
        %s327 = sand.u32 %s165, 1
        %s328 = scalar_lea.sflag [#allocation4], %s327
        %s329 = sand.u32 %s165, 1
        %s330 = smul.addr %s329, 8
        %s331 = scalar_lea.vmem [#allocation13], %s330
        %v333 = vld [vmem:[%s283] sm:$0xff]
        %v334 = vld [vmem:[#allocation5] sm:$0xff]
        %v335 = vld [vmem:[#allocation5 + $0x8] sm:$0x1]
        %336 = vrot.lane.b32.xlu0 %v333, 9
        %v337 = vpop.permute.xlu0 %336
        %v338 = vlaneseq
        %v339 = vshrl.u32 %v338, 7
        %v340 = vsub.s32 0, %v339
        %v341 = vrot.slane %v334, %v340
        %v342 = vmul.f32 %v337, %v341
        %343 = vrot.lane.b32.xlu0 %v333, 8
        %v344 = vpop.permute.xlu0 %343
        %v345 = vlaneseq
        %v346 = vshrl.u32 %v345, 7
        %v347 = vsub.s32 1, %v346
        %v348 = vrot.slane %v334, %v347
        %v349 = vmul.f32 %v344, %v348
        %350 = vrot.lane.b32.xlu0 %v333, 7
        %v351 = vpop.permute.xlu0 %350
        %v352 = vlaneseq
        %v353 = vshrl.u32 %v352, 7
        %v354 = vsub.s32 2, %v353
        %v355 = vrot.slane %v334, %v354
        %v356 = vmul.f32 %v351, %v355
        %357 = vrot.lane.b32.xlu0 %v333, 1
        %v358 = vpop.permute.xlu0 %357
        %v359 = vlaneseq
        %v360 = vshrl.u32 %v359, 7
        %v361 = vsub.s32 3, %v360
        %v362 = vrot.slane %v334, %v361
        %v363 = vmul.f32 %v358, %v362
        %v364 = vlaneseq
        %v365 = vshrl.u32 %v364, 7
        %v366 = vsub.s32 4, %v365
        %v367 = vrot.slane %v334, %v366
        %v368 = vmul.f32 %v333, %v367
        %369 = vrot.lane.b32.xlu0 %v333, 127
        %v370 = vpop.permute.xlu0 %369
        %v371 = vlaneseq
        %v372 = vshrl.u32 %v371, 7
        %v373 = vsub.s32 5, %v372
        %v374 = vrot.slane %v334, %v373
        %v375 = vmul.f32 %v370, %v374
        %376 = vrot.lane.b32.xlu0 %v333, 121
        %v377 = vpop.permute.xlu0 %376
        %v378 = vlaneseq
        %v379 = vshrl.u32 %v378, 7
        %v380 = vsub.s32 6, %v379
        %v381 = vrot.slane %v334, %v380
        %v382 = vmul.f32 %v377, %v381
        %383 = vrot.lane.b32.xlu0 %v333, 120
        %v384 = vpop.permute.xlu0 %383
        %v385 = vlaneseq
        %v386 = vshrl.u32 %v385, 7
        %v387 = vsub.s32 7, %v386
        %v388 = vrot.slane %v334, %v387
        %v389 = vmul.f32 %v384, %v388
        %390 = vrot.lane.b32.xlu0 %v333, 119
        %v391 = vpop.permute.xlu0 %390
        %v392 = vlaneseq
        %v393 = vshrl.u32 %v392, 7
        %v394 = vsub.s32 0, %v393
        %v395 = vrot.slane %v335, %v394
        %v396 = vmul.f32 %v391, %v395
        %v397 = vpack.c.bf16 %v349, %v342
        %v398 = vpack.c.bf16 %v363, %v356
        %v399 = vpack.c.bf16 %v375, %v368
        %v400 = vpack.c.bf16 %v389, %v382
        %v401 = vpack.c.bf16 %v396, %v396
        %v402 = vld [vmem:[#allocation7] sm:$0xf]
        %v403 = vld [vmem:[#allocation8] sm:$0xff]
        %405 = vset.pattern.permute.xlu0 0
        %406 = vperm.xlu0 %405, %v403
        %v407 = vpop.permute.xlu0 %406
        %vm409 = vcmask 588800
        %v411 = vsel %vm409, %v402, 0
        %vm413 = vcmask 1043456
        %v415 = vsel %vm413, %v401, 0
        %417 = vmatprep.subr.bf16.mxu0 0
        %418 = vmatpush1.bf16.msra.mxu0 %v397
        %419 = vmatprep.subr.bf16.mxu0 0
        %420 = vmatpush1.bf16.msra.mxu0 %v398
        %421 = vmatprep.subr.bf16.mxu0 0
        %422 = vmatpush1.bf16.msra.mxu0 %v399
        %423 = vmatprep.subr.bf16.mxu0 0
        %424 = vmatpush1.bf16.msra.mxu0 %v400
        %425 = vmatprep.subr.bf16.mxu0 0
        %426 = vmatpush1.bf16.msra.mxu0 %v415
        %427 = vmatprep.subr.bf16.mxu0 0
        %428 = vmatpush1.bf16.msra.mxu0 0
        %429 = vmatprep.subr.bf16.mxu0 0
        %430 = vmatpush1.bf16.msra.mxu0 0
        %431 = vmatprep.subr.bf16.mxu0 0
        %432 = vmatpush1.bf16.msra.mxu0 0
        %433 = vmatprep.subr.bf16.mxu0 0
        %434 = vmatpush1.bf16.msra.mxu0 0
        %435 = vmatprep.subr.bf16.mxu0 0
        %436 = vmatpush1.bf16.msra.mxu0 0
        %437 = vmatprep.subr.bf16.mxu0 0
        %438 = vmatpush1.bf16.msra.mxu0 0
        %439 = vmatprep.subr.bf16.mxu0 0
        %440 = vmatpush1.bf16.msra.mxu0 0
        %441 = vmatprep.subr.bf16.mxu0 0
        %442 = vmatpush1.bf16.msra.mxu0 0
        %443 = vmatprep.subr.bf16.mxu0 0
        %444 = vmatpush1.bf16.msra.mxu0 0
        %445 = vmatprep.subr.bf16.mxu0 0
        %446 = vmatpush1.bf16.msra.mxu0 0
        %447 = vmatprep.subr.bf16.mxu0 0
        %448 = vmatpush1.bf16.msra.mxu0 0
        %449 = vmatprep.mubr.bf16.mxu0 0
        %450 = vmatmul.mubr.bf16.gmra.mrb[0].mxu0 %v411
        %v451 = vpop.f32.mrb[0].mxu0
        %v452 = vadd.f32 %v407, %v451
        %v453 = vpop.f32.mrb[0].mxu0
        %v454 = vpop.f32.mrb[0].mxu0
        %v455 = vpop.f32.mrb[0].mxu0
        %456 = vdwg.mxu0
        %v457 = vmax.f32 %v452, 0.0
        %458 = vrot.lane.b32.xlu0 %v457, 9
        %v459 = vpop.permute.xlu0 %458
        %v460 = vmul.f32 %v459, %v341
        %461 = vrot.lane.b32.xlu0 %v457, 8
        %v462 = vpop.permute.xlu0 %461
        %v463 = vmul.f32 %v462, %v348
        %464 = vrot.lane.b32.xlu0 %v457, 7
        %v465 = vpop.permute.xlu0 %464
        %v466 = vmul.f32 %v465, %v355
        %467 = vrot.lane.b32.xlu0 %v457, 1
        %v468 = vpop.permute.xlu0 %467
        %v469 = vmul.f32 %v468, %v362
        %v470 = vmul.f32 %v457, %v367
        %471 = vrot.lane.b32.xlu0 %v457, 127
        %v472 = vpop.permute.xlu0 %471
        %v473 = vmul.f32 %v472, %v374
        %474 = vrot.lane.b32.xlu0 %v457, 121
        %v475 = vpop.permute.xlu0 %474
        %v476 = vmul.f32 %v475, %v381
        %477 = vrot.lane.b32.xlu0 %v457, 120
        %v478 = vpop.permute.xlu0 %477
        %v479 = vmul.f32 %v478, %v388
        %480 = vrot.lane.b32.xlu0 %v457, 119
        %v481 = vpop.permute.xlu0 %480
        %v482 = vmul.f32 %v481, %v395
        %v483 = vpack.c.bf16 %v463, %v460
        %v484 = vpack.c.bf16 %v469, %v466
        %v485 = vpack.c.bf16 %v473, %v470
        %v486 = vpack.c.bf16 %v479, %v476
        %v487 = vpack.c.bf16 %v482, %v482
        %v488 = vld [vmem:[#allocation10] sm:$0xf]
        %v489 = vld [vmem:[#allocation11] sm:$0xff]
        %491 = vset.pattern.permute.xlu0 0
        %492 = vperm.xlu0 %491, %v489
        %v493 = vpop.permute.xlu0 %492
        %v496 = vsel %vm409, %v488, 0
        %v499 = vsel %vm413, %v487, 0
        %501 = vmatprep.subr.bf16.mxu0 0
        %502 = vmatpush1.bf16.msra.mxu0 %v483
        %503 = vmatprep.subr.bf16.mxu0 0
        %504 = vmatpush1.bf16.msra.mxu0 %v484
        %505 = vmatprep.subr.bf16.mxu0 0
        %506 = vmatpush1.bf16.msra.mxu0 %v485
        %507 = vmatprep.subr.bf16.mxu0 0
        %508 = vmatpush1.bf16.msra.mxu0 %v486
        %509 = vmatprep.subr.bf16.mxu0 0
        %510 = vmatpush1.bf16.msra.mxu0 %v499
        %511 = vmatprep.subr.bf16.mxu0 0
        %512 = vmatpush1.bf16.msra.mxu0 0
        %513 = vmatprep.subr.bf16.mxu0 0
        %514 = vmatpush1.bf16.msra.mxu0 0
        %515 = vmatprep.subr.bf16.mxu0 0
        %516 = vmatpush1.bf16.msra.mxu0 0
        %517 = vmatprep.subr.bf16.mxu0 0
        %518 = vmatpush1.bf16.msra.mxu0 0
        %519 = vmatprep.subr.bf16.mxu0 0
        %520 = vmatpush1.bf16.msra.mxu0 0
        %521 = vmatprep.subr.bf16.mxu0 0
        %522 = vmatpush1.bf16.msra.mxu0 0
        %523 = vmatprep.subr.bf16.mxu0 0
        %524 = vmatpush1.bf16.msra.mxu0 0
        %525 = vmatprep.subr.bf16.mxu0 0
        %526 = vmatpush1.bf16.msra.mxu0 0
        %527 = vmatprep.subr.bf16.mxu0 0
        %528 = vmatpush1.bf16.msra.mxu0 0
        %529 = vmatprep.subr.bf16.mxu0 0
        %530 = vmatpush1.bf16.msra.mxu0 0
        %531 = vmatprep.subr.bf16.mxu0 0
        %532 = vmatpush1.bf16.msra.mxu0 0
        %533 = vmatprep.mubr.bf16.mxu0 0
        %534 = vmatmul.mubr.bf16.gmra.mrb[0].mxu0 %v496
        %v535 = vpop.f32.mrb[0].mxu0
        %v536 = vadd.f32 %v493, %v535
        %v537 = vpop.f32.mrb[0].mxu0
        %v538 = vpop.f32.mrb[0].mxu0
        %v539 = vpop.f32.mrb[0].mxu0
        %540 = vdwg.mxu0
        %v541 = vmax.f32 %v536, 0.0
        %542 = vst [vmem:[%s331] sm:$0xff] %v541
        %s543 = sand.u32 %s165, 1
        %s544 = scalar_lea.sflag [#allocation4], %s543
        %s545 = sand.u32 %s165, 1
        %s546 = smul.addr %s545, 8
        %s547 = scalar_lea.vmem [#allocation13], %s546
        // Predicated region
        $region69: #{downsampling_block.1} parent=43 // pred_check
          %p548 = pneg %p175
        $region70: #{downsampling_block.1} parent=43 // pred_check_branch
          %550 = sbr.rel (%p548) target = $region72
        $region71: #{downsampling_block.1} parent=43 // pred_region
          %s552 = ssub.s32 128, 128
          %553 = vsyncadd %s544, %s552
          %s554 = smul.addr %s26, 128
          %s555 = scalar_lea.hbm %s6, %s554
          %s557 = sshll.u32 %s547, 4
          %s558 = int_to_ptr.vmem [resolvable:$true] %s557
          %560 = dma.vmem_to_hbm [thread:$0]  %s558, 128, %s555, %s544
        $region72: #{downsampling_block.1} parent=43 // pred_fallthru
          _
      $region44: #{downsampling_block.1} parent=5 // pred_fallthru
        _
      %p561 = scmp.le.s32.totalorder 2, %s21
      // Predicated region
      $region73: #{downsampling_block.1} parent=5 // pred_check
        %p562 = pneg %p561
      $region74: #{downsampling_block.1} parent=5 // pred_check_branch
        %564 = sbr.rel (%p562) target = $region76
      $region75: #{downsampling_block.1} parent=5 // pred_region
        %s565 = ssub.s32 %s21, 2
        // Predicated region
        $region77: #{downsampling_block.1} parent=75 // pred_check
          %p566 = pneg %p181
        $region78: #{downsampling_block.1} parent=75 // pred_check_branch
          %568 = sbr.rel (%p566) target = $region80
        $region79: #{downsampling_block.1} parent=75 // pred_region
          %s569 = sand.u32 %s166, 1
          %s570 = scalar_lea.sflag [#allocation4], %s569
          %s571 = sand.u32 %s166, 1
          %s572 = smul.addr %s571, 8
          %s573 = scalar_lea.vmem [#allocation13], %s572
          %574 = dma.done %s570, 128
        $region80: #{downsampling_block.1} parent=75 // pred_fallthru
          _
      $region76: #{downsampling_block.1} parent=5 // pred_fallthru
        _
    $region6: #{downsampling_block.1} parent=1 // loop_footer
      %s25 = sadd.s32 1, %s21
    $region7: #{downsampling_block.1} parent=1 // loop_footer_branch
      %20 = sbr.rel target = $region3
    $region8: #{downsampling_block.1} parent=1 // loop_exit
      _
    %575 = vsyncpa [#allocation3], 1
    %s576 = scalar_lea.sflag [#allocation3], 1
    %577 = vsyncpa %s576, 1
    %578 = vsyncpa [#allocation6], 1
    %579 = vsyncpa [#allocation9], 1
    %580 = vsyncpa [#allocation12], 1
    %581 = vsyncpa [#allocation4], 1
    %s582 = scalar_lea.sflag [#allocation4], 1
    %583 = vsyncpa %s582, 1

</llo_original>
